<compile_context>
chip_gen: v7x
topology: tpu7x:2x2x1
jax: 0.10.0
libtpu: 0.0.40
codegen_flags: <defaults>
</compile_context>

<pallas_src>
from typing import Any, NamedTuple

import jax
import jax.numpy as jnp
from jax import lax
from jax.experimental import pallas as pl
from jax.experimental.pallas import tpu as pltpu


# ----------------------------------------------------------------------------- helpers

def _round_up(x, m):
    return ((x + m - 1) // m) * m


def _cdiv(a, b):
    return -(-a // b)


def _vmem_budget_bytes():
    """~75% of physical VMEM (capped at 100 MiB): ~96 MiB on v5e/v6e, ~48 MiB on v7x."""
    cap = 128 * 1024 * 1024
    try:
        info = pltpu.get_tpu_info()
        cap = int(getattr(info, "vmem_capacity_bytes", cap)) or cap
    except Exception:
        pass
    return min(cap * 3 // 4, 100 * 1024 * 1024)


_SB_OK = None


def _probe_kernel(x_ref, o_ref):
    o_ref[...] = x_ref[...]


def _single_buffer_supported():
    """One-time probe: can this build lower Buffered(1) grid-invariant blocks?"""
    global _SB_OK
    if _SB_OK is None:
        try:
            fn = pl.pallas_call(
                _probe_kernel,
                out_shape=jax.ShapeDtypeStruct((8, 128), jnp.float32),
                grid_spec=pltpu.PrefetchScalarGridSpec(
                    num_scalar_prefetch=0,
                    grid=(2,),
                    in_specs=[pl.BlockSpec((8, 128), lambda i: (0, 0),
                                           pipeline_mode=pl.Buffered(1))],
                    out_specs=pl.BlockSpec((8, 128), lambda i: (0, 0)),
                ),
            )
            jax.block_until_ready(fn(jnp.zeros((8, 128), jnp.float32)))
            _SB_OK = True
        except Exception:
            _SB_OK = False
    return _SB_OK


def _const_spec(shape, n_grid_args, single_buffer):
    """BlockSpec for a grid-invariant (weight/bias) operand."""
    if n_grid_args == 1:
        index_map = lambda i: tuple(0 for _ in shape)
    else:
        index_map = lambda i, k: tuple(0 for _ in shape)
    if single_buffer:
        return pl.BlockSpec(shape, index_map, pipeline_mode=pl.Buffered(1))
    return pl.BlockSpec(shape, index_map)


def _rows_cap(budget, const_bytes, per_row_bytes):
    """Largest multiple-of-8 row tile that fits the VMEM budget (>= 8)."""
    avail = budget - const_bytes - (2 << 20)  # ~2 MiB slack for compiler scratch
    if avail < 8 * per_row_bytes:
        return 8
    return int(avail // per_row_bytes) // 8 * 8


def _pick_k_tile(hidden, k_tile):
    if k_tile is not None:
        if hidden % k_tile == 0 and k_tile % 128 == 0:
            return int(k_tile)
        return None
    for cand in (512, 256, 128):
        if hidden % cand == 0:
            return cand
    return None


# ----------------------------------------------------------------------------- params

class PreparedParams(NamedTuple):
    """Pre-padded / pre-cast parameters; build once with prepare_params() and reuse."""
    w1: Any        # (H, H)     compute dtype
    lnp: Any       # (3, H)     f32 rows: [b1, gamma, beta]
    w2: Any        # (H, Lpad)  compute dtype (label dim lane-padded to 128)
    b2: Any        # (1, Lpad)  f32
    hidden: int
    label_dim: int
    compute_dtype: Any


def prepare_params(params, *, compute_dtype=jnp.bfloat16):
    """Hoists the weight pad + dtype cast out of the per-call wrapper."""
    w1, b1, gamma, beta, w2, b2 = params
    hidden = w1.shape[0]
    label_dim = w2.shape[1]
    l_pad = _round_up(label_dim, 128)

    w1c = w1.astype(compute_dtype)
    w2c = jnp.pad(w2, ((0, 0), (0, l_pad - label_dim))).astype(compute_dtype)
    lnp = jnp.stack([b1.astype(jnp.float32),
                     gamma.astype(jnp.float32),
                     beta.astype(jnp.float32)], axis=0)             # (3, H)
    b2p = jnp.pad(b2.astype(jnp.float32), (0, l_pad - label_dim)).reshape(1, l_pad)
    return PreparedParams(w1c, lnp, w2c, b2p, int(hidden), int(label_dim), compute_dtype)


# ----------------------------------------------------------------------------- kernels

def _region_cls_kernel(x_ref, w1_ref, lnp_ref, w2_ref, b2_ref, o_ref):
    """Monolithic-W1 path: whole H x H weight resident, one row tile per step."""
    x = x_ref[...]                                                   # (TM, H) compute dtype
    lnp = lnp_ref[...]                                               # (3, H) f32

    # Linear 1 (MXU, f32 accumulate) + bias, ReLU.
    h = jnp.dot(x, w1_ref[...], preferred_element_type=jnp.float32) + lnp[0:1, :]
    h = jnp.maximum(h, 0.0)

    # BertLayerNorm (two-pass variance, eps=1e-12) -- matches the PyTorch form.
    mean = jnp.mean(h, axis=-1, keepdims=True)
    c = h - mean
    var = jnp.mean(c * c, axis=-1, keepdims=True)
    h = c * lax.rsqrt(var + 1e-12)
    h = h * lnp[1:2, :] + lnp[2:3, :]

    # Linear 2 (MXU, lane-padded label dim) + bias.
    out = jnp.dot(h.astype(w2_ref.dtype), w2_ref[...],
                  preferred_element_type=jnp.float32) + b2_ref[...]
    o_ref[...] = out.astype(o_ref.dtype)


def _region_cls_kernel_ktiled(x_ref, w1_ref, lnp_ref, w2_ref, b2_ref, o_ref, acc_ref):
    """K-tiled W1 path for very large hidden sizes (W1 does not fit VMEM whole)."""
    k = pl.program_id(1)

    @pl.when(k == 0)
    def _():
        acc_ref[...] = jnp.zeros_like(acc_ref)

    acc_ref[...] += jnp.dot(x_ref[...], w1_ref[...],
                            preferred_element_type=jnp.float32)

    @pl.when(k == pl.num_programs(1) - 1)
    def _():
        lnp = lnp_ref[...]                                           # (3, H) f32
        h = acc_ref[...] + lnp[0:1, :]
        h = jnp.maximum(h, 0.0)
        mean = jnp.mean(h, axis=-1, keepdims=True)
        c = h - mean
        var = jnp.mean(c * c, axis=-1, keepdims=True)
        h = c * lax.rsqrt(var + 1e-12)
        h = h * lnp[1:2, :] + lnp[2:3, :]
        out = jnp.dot(h.astype(w2_ref.dtype), w2_ref[...],
                      preferred_element_type=jnp.float32) + b2_ref[...]
        o_ref[...] = out.astype(o_ref.dtype)


# ----------------------------------------------------------------------------- wrapper

def region_classification(x, params, *, tile_rows=512, compute_dtype=jnp.bfloat16,
                          single_buffer_weights=True, vmem_limit_bytes=None,
                          k_tiling_threshold_bytes=24 * 1024 * 1024,
                          force_k_tiled=False, k_tile=None):
    """x: (..., H). Returns logits (..., label_dim) in x.dtype.

    `params` may be the raw 6-tuple (w1, b1, gamma, beta, w2, b2) or a
    PreparedParams from prepare_params() (preferred: cast/pad done once)."""
    if isinstance(params, PreparedParams):
        prep = params
    else:
        prep = prepare_params(params, compute_dtype=compute_dtype)

    hidden = prep.hidden
    label_dim = prep.label_dim
    l_pad = prep.w2.shape[1]
    cdt = prep.compute_dtype
    csize = jnp.dtype(cdt).itemsize
    out_dtype = x.dtype
    osize = jnp.dtype(out_dtype).itemsize

    lead_shape = x.shape[:-1]
    x2 = x.reshape(-1, hidden).astype(cdt)
    n = x2.shape[0]

    budget = int(vmem_limit_bytes) if vmem_limit_bytes is not None else _vmem_budget_bytes()

    sb = bool(single_buffer_weights) and _single_buffer_supported()
    nbuf_w = 1 if sb else 2  # if Buffered(1) is unsupported, budget for 2x weight buffers

    # K-tiled path when W1 alone is too large to sit whole in VMEM (e.g. v7x, H>=4096 bf16).
    w1_bytes = hidden * hidden * csize
    use_k = bool(force_k_tiled) or (w1_bytes > k_tiling_threshold_bytes)
    tk = _pick_k_tile(hidden, k_tile) if use_k else None
    if use_k and tk is None:
        # TODO(synk): hidden not a multiple of 128 -> cannot lane-tile K; monolithic only.
        use_k = False

    # Generation-aware row-tile cap (VMEM budget), then even out tiles across the grid.
    if not use_k:
        const_bytes = nbuf_w * (hidden * hidden * csize + hidden * l_pad * csize
                                + 8 * hidden * 4 + 8 * l_pad * 4)
        per_row = 2 * hidden * csize + 2 * l_pad * osize + 2 * hidden * 4
    else:
        const_bytes = (nbuf_w * (hidden * l_pad * csize + 8 * hidden * 4 + 8 * l_pad * 4)
                       + 2 * tk * hidden * csize)                    # W1 k-slices, 2 bufs
        per_row = 2 * tk * csize + 2 * l_pad * osize + 3 * hidden * 4  # x, out, acc + LN tmp
    tm_cap = _rows_cap(budget, const_bytes, per_row)

    tm_req = _round_up(max(int(tile_rows), 8), 8)
    n8 = _round_up(n, 8)
    if n8 <= tm_req:
        tm = n8
    else:
        g = _cdiv(n, tm_req)                    # even out tiles -> bounded pad waste,
        tm = _round_up(_cdiv(n, g), 8)          # and >= 2 grid steps (v7x megacore).
    tm = max(8, min(tm, tm_cap))
    n_pad = _round_up(n, tm)
    if n_pad != n:
        x2 = jnp.pad(x2, ((0, n_pad - n), (0, 0)))

    cost = pl.CostEstimate(
        flops=2 * n_pad * hidden * (hidden + l_pad) + 10 * n_pad * hidden,
        transcendentals=n_pad,                                       # one rsqrt per row
        bytes_accessed=(n_pad * hidden * csize                       # x
                        + hidden * (hidden + l_pad) * csize          # W1, W2
                        + (4 * hidden + l_pad) * 4                   # lnp, b2
                        + n_pad * l_pad * osize),                    # logits
    )

    if not use_k:
        grid = (n_pad // tm,)
        in_specs = [
            pl.BlockSpec((tm, hidden), lambda i: (i, 0)),            # x tile (double-buffered)
            _const_spec((hidden, hidden), 1, sb),                    # W1 (resident)
            _const_spec((3, hidden), 1, sb),                         # [b1, gamma, beta]
            _const_spec((hidden, l_pad), 1, sb),                     # W2 (resident)
            _const_spec((1, l_pad), 1, sb),                          # b2
        ]
        out_specs = pl.BlockSpec((tm, l_pad), lambda i: (i, 0))
        kernel = _region_cls_kernel
        scratch = []
        dims = ("parallel",)
    else:
        grid = (n_pad // tm, hidden // tk)
        in_specs = [
            pl.BlockSpec((tm, tk), lambda i, k: (i, k)),             # x k-slice
            pl.BlockSpec((tk, hidden), lambda i, k: (k, 0)),         # W1 k-slice
            _const_spec((3, hidden), 2, sb),                         # [b1, gamma, beta]
            _const_spec((hidden, l_pad), 2, sb),                     # W2 (resident)
            _const_spec((1, l_pad), 2, sb),                          # b2
        ]
        out_specs = pl.BlockSpec((tm, l_pad), lambda i, k: (i, 0))
        kernel = _region_cls_kernel_ktiled
        scratch = [pltpu.VMEM((tm, hidden), jnp.float32)]            # f32 accumulator
        dims = ("parallel", "arbitrary")

    out = pl.pallas_call(
        kernel,
        out_shape=jax.ShapeDtypeStruct((n_pad, l_pad), out_dtype),
        grid_spec=pltpu.PrefetchScalarGridSpec(
            num_scalar_prefetch=0,
            grid=grid,
            in_specs=in_specs,
            out_specs=out_specs,
            scratch_shapes=scratch,
        ),
        compiler_params=pltpu.CompilerParams(
            dimension_semantics=dims,
            vmem_limit_bytes=budget,
        ),
        cost_estimate=cost,
    )(x2, prep.w1, prep.lnp, prep.w2, prep.b2)

    out = out[:n, :label_dim]
    return out.reshape(*lead_shape, label_dim)


# ----------------------------------------------------------------------------- reference

def init_params(key, hidden_size, label_dim):
    """Deterministic synthetic params matching the module's shapes.
    PyTorch nn.Linear weight is (out, in); we store transposed (in, out)."""
    k1, k2, k3, k4 = jax.random.split(key, 4)
    w1 = jax.random.normal(k1, (hidden_size, hidden_size), jnp.float32) * 0.02
    b1 = jax.random.normal(k2, (hidden_size,), jnp.float32) * 0.02
    gamma = jnp.ones((hidden_size,), jnp.float32)
    beta = jnp.zeros((hidden_size,), jnp.float32)
    w2 = jax.random.normal(k3, (hidden_size, label_dim), jnp.float32) * 0.02
    b2 = jax.random.normal(k4, (label_dim,), jnp.float32) * 0.02
    return (w1, b1, gamma, beta, w2, b2)


def _ref_forward(x, params, compute_dtype=jnp.float32):
    """Pure-JAX reference of the PyTorch forward (for correctness checks)."""
    w1, b1, gamma, beta, w2, b2 = params
    xc = x.astype(compute_dtype)
    h = jnp.dot(xc, w1.astype(compute_dtype), preferred_element_type=jnp.float32) + b1
    h = jnp.maximum(h, 0.0)
    mean = jnp.mean(h, axis=-1, keepdims=True)
    var = jnp.mean((h - mean) ** 2, axis=-1, keepdims=True)
    h = (h - mean) / jnp.sqrt(var + 1e-12)
    h = h * gamma + beta
    return jnp.dot(h.astype(compute_dtype), w2.astype(compute_dtype),
                   preferred_element_type=jnp.float32) + b2


# ----------------------------------------------------------------------------- main

if __name__ == "__main__":
    batch, seq, hidden, label_dim = 2, 8, 32, 12

    key = jax.random.PRNGKey(0)
    kx, kp = jax.random.split(key)
    x = jax.random.normal(kx, (batch, seq, hidden), jnp.float32)
    params = init_params(kp, hidden, label_dim)

    # Prepare (pad + cast) weights ONCE per dtype; reused across calls.
    prep_f32 = prepare_params(params, compute_dtype=jnp.float32)
    prep_bf16 = prepare_params(params, compute_dtype=jnp.bfloat16)

    # f32 compute path: strict check against the pure-JAX reference.
    out_f32 = jax.block_until_ready(region_classification(x, prep_f32))
    ref_f32 = _ref_forward(x, params, compute_dtype=jnp.float32)
    assert out_f32.shape == (batch, seq, label_dim)
    assert jnp.allclose(out_f32, ref_f32, atol=1e-4, rtol=1e-4)

    # bf16 compute path (default): matching bf16 reference + loose f32 sanity bound.
    out_bf16 = jax.block_until_ready(region_classification(x, prep_bf16))
    ref_bf16 = _ref_forward(x, params, compute_dtype=jnp.bfloat16)
    assert out_bf16.shape == (batch, seq, label_dim)
    assert jnp.allclose(out_bf16, ref_bf16, atol=2e-2, rtol=2e-2)
    assert jnp.allclose(out_bf16, ref_f32, atol=1e-1, rtol=1e-1)

    # Row-padding path: token count not a multiple of the row tile.
    x_odd = jax.random.normal(kx, (3, 5, hidden), jnp.float32)
    out_odd = jax.block_until_ready(region_classification(x_odd, prep_f32))
    ref_odd = _ref_forward(x_odd, params, compute_dtype=jnp.float32)
    assert out_odd.shape == (3, 5, label_dim)
    assert jnp.allclose(out_odd, ref_odd, atol=1e-4, rtol=1e-4)

    # K-tiled W1 path (forced at a small hidden size so it is exercised here;
    # in production it triggers automatically when W1 exceeds ~24 MiB).
    hidden_k = 256
    params_k = init_params(kp, hidden_k, label_dim)
    prep_k = prepare_params(params_k, compute_dtype=jnp.float32)
    x_k = jax.random.normal(kx, (batch, seq, hidden_k), jnp.float32)
    out_k = jax.block_until_ready(
        region_classification(x_k, prep_k, force_k_tiled=True, k_tile=128))
    ref_k = _ref_forward(x_k, params_k, compute_dtype=jnp.float32)
    assert out_k.shape == (batch, seq, label_dim)
    assert jnp.allclose(out_k, ref_k, atol=1e-4, rtol=1e-4)

    print("KERNEL_OK")
</pallas_src>

<mosaic_0001>
module attributes {stable_mosaic.version = 11 : i64} {
  func.func @_probe_kernel(%arg0: i32, %arg1: memref<8x128xf32, #tpu.memory_space<vmem>>, %arg2: memref<8x128xf32, #tpu.memory_space<vmem>>) attributes {dimension_semantics = [#tpu.dimension_semantics<arbitrary>], iteration_bounds = array<i64: 2>, scalar_prefetch = 0 : i64, scratch_operands = 0 : i64, tpu.core_type = #tpu.core_type<tc>, window_params = [{pipeline_mode = #tpu.pipeline_mode<synchronous>, transform_indices = @transform_0, window_bounds = array<i64: 8, 128>}, {pipeline_mode = #tpu.pipeline_mode<synchronous>, transform_indices = @transform_1, window_bounds = array<i64: 8, 128>}]} {
    %c0 = arith.constant 0 : index
    %c0_0 = arith.constant 0 : index
    %0 = vector.load %arg1[%c0, %c0_0] : memref<8x128xf32, #tpu.memory_space<vmem>>, vector<8x128xf32>
    %c0_1 = arith.constant 0 : index
    %c0_2 = arith.constant 0 : index
    %1 = vector.load %arg2[%c0_1, %c0_2] : memref<8x128xf32, #tpu.memory_space<vmem>>, vector<8x128xf32>
    tpu.vector_store %arg2[%c0_1, %c0_2], %0 {strides = array<i32>} : memref<8x128xf32, #tpu.memory_space<vmem>>, vector<8x128xf32>,
    return
  }
  func.func @transform_0(%arg0: i32) -> (i32, i32) {
    %c0_i32 = arith.constant 0 : i32
    %c0_i32_0 = arith.constant 0 : i32
    %c0_i32_1 = arith.constant 0 : i32
    return %c0_i32, %c0_i32_0 : i32, i32
  }
  func.func @transform_1(%arg0: i32) -> (i32, i32) {
    %c0_i32 = arith.constant 0 : i32
    %c0_i32_0 = arith.constant 0 : i32
    %c0_i32_1 = arith.constant 0 : i32
    return %c0_i32, %c0_i32_0 : i32, i32
  }
}

module attributes {stable_mosaic.version = 11 : i64} {
  func.func @_region_cls_kernel(%arg0: i32, %arg1: memref<16x32xf32, #tpu.memory_space<vmem>>, %arg2: memref<32x32xf32, #tpu.memory_space<vmem>>, %arg3: memref<3x32xf32, #tpu.memory_space<vmem>>, %arg4: memref<32x128xf32, #tpu.memory_space<vmem>>, %arg5: memref<1x128xf32, #tpu.memory_space<vmem>>, %arg6: memref<16x128xf32, #tpu.memory_space<vmem>>) attributes {dimension_semantics = [#tpu.dimension_semantics<parallel>], iteration_bounds = array<i64: 1>, scalar_prefetch = 0 : i64, scratch_operands = 0 : i64, tpu.core_type = #tpu.core_type<tc>, window_params = [{transform_indices = @transform_0, window_bounds = array<i64: 16, 32>}, {pipeline_mode = #tpu.pipeline_mode<synchronous>, transform_indices = @transform_1, window_bounds = array<i64: 32, 32>}, {pipeline_mode = #tpu.pipeline_mode<synchronous>, transform_indices = @transform_2, window_bounds = array<i64: 3, 32>}, {pipeline_mode = #tpu.pipeline_mode<synchronous>, transform_indices = @transform_3, window_bounds = array<i64: 32, 128>}, {pipeline_mode = #tpu.pipeline_mode<synchronous>, transform_indices = @transform_4, window_bounds = array<i64: 1, 128>}, {transform_indices = @transform_5, window_bounds = array<i64: 16, 128>}]} {
    %c0 = arith.constant 0 : index
    %c0_0 = arith.constant 0 : index
    %0 = vector.load %arg1[%c0, %c0_0] : memref<16x32xf32, #tpu.memory_space<vmem>>, vector<16x32xf32>
    %c0_1 = arith.constant 0 : index
    %c0_2 = arith.constant 0 : index
    %1 = vector.load %arg3[%c0_1, %c0_2] : memref<3x32xf32, #tpu.memory_space<vmem>>, vector<3x32xf32>
    %c0_3 = arith.constant 0 : index
    %c0_4 = arith.constant 0 : index
    %2 = vector.load %arg2[%c0_3, %c0_4] : memref<32x32xf32, #tpu.memory_space<vmem>>, vector<32x32xf32>
    %cst = arith.constant dense<0.000000e+00> : vector<16x32xf32>
    %3 = tpu.matmul %0, %2, %cst {dimension_numbers = #tpu.dot_dimension_numbers<[1], [0], [0], [1], [0, 0, 1, 1], [], []>} : vector<16x32xf32>, vector<32x32xf32>, vector<16x32xf32> -> vector<16x32xf32>
    %4 = vector.extract_strided_slice %1 {offsets = [0, 0], sizes = [1, 32], strides = [1, 1]} : vector<3x32xf32> to vector<1x32xf32>
    %5 = vector.broadcast %4 : vector<1x32xf32> to vector<16x32xf32>
    %6 = arith.addf %3, %5 : vector<16x32xf32>
    %cst_5 = arith.constant 0.000000e+00 : f32
    %7 = vector.broadcast %cst_5 : f32 to vector<16x32xf32>
    %8 = arith.maximumf %6, %7 : vector<16x32xf32>
    %cst_6 = arith.constant dense<0.000000e+00> : vector<16xf32>
    %9 = vector.multi_reduction <add>, %8, %cst_6 [1] : vector<16x32xf32> to vector<16xf32>
    %10 = vector.shape_cast %9 : vector<16xf32> to vector<16x1xf32>
    %cst_7 = arith.constant 3.200000e+01 : f32
    %11 = vector.broadcast %cst_7 : f32 to vector<16x1xf32>
    %12 = arith.divf %10, %11 : vector<16x1xf32>
    %13 = vector.broadcast %12 : vector<16x1xf32> to vector<16x32xf32>
    %14 = arith.subf %8, %13 : vector<16x32xf32>
    %15 = arith.mulf %14, %14 : vector<16x32xf32>
    %cst_8 = arith.constant dense<0.000000e+00> : vector<16xf32>
    %16 = vector.multi_reduction <add>, %15, %cst_8 [1] : vector<16x32xf32> to vector<16xf32>
    %17 = vector.shape_cast %16 : vector<16xf32> to vector<16x1xf32>
    %cst_9 = arith.constant 3.200000e+01 : f32
    %18 = vector.broadcast %cst_9 : f32 to vector<16x1xf32>
    %19 = arith.divf %17, %18 : vector<16x1xf32>
    %cst_10 = arith.constant 9.99999996E-13 : f32
    %20 = vector.broadcast %cst_10 : f32 to vector<16x1xf32>
    %21 = arith.addf %19, %20 : vector<16x1xf32>
    %22 = math.rsqrt %21 : vector<16x1xf32>
    %23 = vector.broadcast %22 : vector<16x1xf32> to vector<16x32xf32>
    %24 = arith.mulf %14, %23 : vector<16x32xf32>
    %25 = vector.extract_strided_slice %1 {offsets = [1, 0], sizes = [1, 32], strides = [1, 1]} : vector<3x32xf32> to vector<1x32xf32>
    %26 = vector.broadcast %25 : vector<1x32xf32> to vector<16x32xf32>
    %27 = arith.mulf %24, %26 : vector<16x32xf32>
    %28 = vector.extract_strided_slice %1 {offsets = [2, 0], sizes = [1, 32], strides = [1, 1]} : vector<3x32xf32> to vector<1x32xf32>
    %29 = vector.broadcast %28 : vector<1x32xf32> to vector<16x32xf32>
    %30 = arith.addf %27, %29 : vector<16x32xf32>
    %c0_11 = arith.constant 0 : index
    %c0_12 = arith.constant 0 : index
    %31 = vector.load %arg4[%c0_11, %c0_12] : memref<32x128xf32, #tpu.memory_space<vmem>>, vector<32x128xf32>
    %cst_13 = arith.constant dense<0.000000e+00> : vector<16x128xf32>
    %32 = tpu.matmul %30, %31, %cst_13 {dimension_numbers = #tpu.dot_dimension_numbers<[1], [0], [0], [1], [0, 0, 1, 1], [], []>} : vector<16x32xf32>, vector<32x128xf32>, vector<16x128xf32> -> vector<16x128xf32>
    %c0_14 = arith.constant 0 : index
    %c0_15 = arith.constant 0 : index
    %33 = vector.load %arg5[%c0_14, %c0_15] : memref<1x128xf32, #tpu.memory_space<vmem>>, vector<1x128xf32>
    %34 = vector.broadcast %33 : vector<1x128xf32> to vector<16x128xf32>
    %35 = arith.addf %32, %34 : vector<16x128xf32>
    %c0_16 = arith.constant 0 : index
    %c0_17 = arith.constant 0 : index
    %36 = vector.load %arg6[%c0_16, %c0_17] : memref<16x128xf32, #tpu.memory_space<vmem>>, vector<16x128xf32>
    tpu.vector_store %arg6[%c0_16, %c0_17], %35 {strides = array<i32>} : memref<16x128xf32, #tpu.memory_space<vmem>>, vector<16x128xf32>,
    return
  }
  func.func @transform_0(%arg0: i32) -> (i32, i32) {
    %c0_i32 = arith.constant 0 : i32
    %c0_i32_0 = arith.constant 0 : i32
    return %arg0, %c0_i32 : i32, i32
  }
  func.func @transform_1(%arg0: i32) -> (i32, i32) {
    %c0_i32 = arith.constant 0 : i32
    %c0_i32_0 = arith.constant 0 : i32
    %c0_i32_1 = arith.constant 0 : i32
    return %c0_i32, %c0_i32_0 : i32, i32
  }
  func.func @transform_2(%arg0: i32) -> (i32, i32) {
    %c0_i32 = arith.constant 0 : i32
    %c0_i32_0 = arith.constant 0 : i32
    %c0_i32_1 = arith.constant 0 : i32
    return %c0_i32, %c0_i32_0 : i32, i32
  }
  func.func @transform_3(%arg0: i32) -> (i32, i32) {
    %c0_i32 = arith.constant 0 : i32
    %c0_i32_0 = arith.constant 0 : i32
    %c0_i32_1 = arith.constant 0 : i32
    return %c0_i32, %c0_i32_0 : i32, i32
  }
  func.func @transform_4(%arg0: i32) -> (i32, i32) {
    %c0_i32 = arith.constant 0 : i32
    %c0_i32_0 = arith.constant 0 : i32
    %c0_i32_1 = arith.constant 0 : i32
    return %c0_i32, %c0_i32_0 : i32, i32
  }
  func.func @transform_5(%arg0: i32) -> (i32, i32) {
    %c0_i32 = arith.constant 0 : i32
    %c0_i32_0 = arith.constant 0 : i32
    return %arg0, %c0_i32 : i32, i32
  }
}

</mosaic_0001>

<llo_original>
// kernel: tpu_custom_call.1
$region0: #{tpu_custom_call.1}
  #allocation0 [shape = 'u32[]', space=smem, size = 0x4, offset = 0x4, fixed_abs, tag = 'smem constant byte address 0x4 - core index']
  #allocation1 [shape = 'u32[144,128]{1,0:T(1,128)}', space=vmem, size = 0x12000, scoped, tag = 'internal scratch']
  %s0 = inlined_call_operand.hbm [shape: f32[8,128], index: 0, kind: input, shape index: {}]
  %s1 = inlined_call_operand.hbm [shape: f32[8,128], index: 1, kind: output, shape index: {}]
  %s2 = sld [smem:[#allocation0]]
  $region41: #{tpu_custom_call.1} parent=0
    _
  %s4 = ssub.s32 1, %s2
  %s5 = scalar_select 0, %s4, %s2
  $region1: #{tpu_custom_call.1} parent=0
    #allocation2 [shape = 'u8[4096]{0}', space=vmem, size = 0x1000, scoped, tag = 'input window, operand 0, single buffered']
    #allocation3 [shape = 's32[2]{0}', space=sflag, size = 0x8, scoped, tag = 'scoped memory for tpu_custom_call.1']
    #allocation4 [shape = 's32[2]{0}', space=sflag, size = 0x8, scoped, tag = 'scoped memory for tpu_custom_call.1']
    #allocation5 [shape = 'u8[4096]{0}', space=vmem, size = 0x1000, scoped, tag = 'output window, operand 0, single buffered']
    %6 = vsyncpa [#allocation3], 0
    %7 = vsyncpa [#allocation4], 0
    loop: start=0, step=1, limit=4
    $region2: #{tpu_custom_call.1} parent=1 // loop_pre_header
      _
    $region3: #{tpu_custom_call.1} parent=1 // loop_header
      %s9 = sphi 0, %s13
      %p10 = scmp.ge.s32.totalorder %s9, 4
      %s17 = sphi 0, %s17
      %s19 = sphi 0, %s17
      %s20 = sphi 0, %s19
      %s34 = sphi 0, %s20
      %s38 = sphi 0, %s38
      %s40 = sphi 0, %s38
      %s41 = sphi 0, %s40
      %s55 = sphi 0, %s41
    $region4: #{tpu_custom_call.1} parent=1 // loop_header_branch
      %12 = sbr.rel (%p10) target = $region8
    $region5: #{tpu_custom_call.1} parent=1 // loop_body
      %s14 = ssub.s32 %s9, 1
      %s15 = ssub.s32 %s9, 2
      %s16 = sadd.s32 %s9, 1
      %s18 = sadd.s32 %s17, 1
      %p21 = scmp.eq.s32.totalorder %s9, 1
      %p22 = scmp.ne.s32.totalorder %s17, %s19
      %p23 = scmp.eq.s32.totalorder %s9, 0
      %p24 = por %p22, %p23
      %p25 = scmp.ne.s32.totalorder %s17, %s19
      %p26 = scmp.eq.s32.totalorder %s14, 1
      %p27 = por %p25, %p26
      %p28 = scmp.ne.s32.totalorder %s19, %s20
      %p29 = scmp.eq.s32.totalorder %s14, 0
      %p30 = por %p28, %p29
      %p31 = scmp.ne.s32.totalorder %s19, %s20
      %p32 = scmp.eq.s32.totalorder %s15, 1
      %p33 = por %p31, %p32
      %p35 = scmp.ne.s32.totalorder %s20, %s34
      %p36 = scmp.eq.s32.totalorder %s15, 0
      %p37 = por %p35, %p36
      %s39 = sadd.s32 %s38, 1
      %p42 = scmp.eq.s32.totalorder %s9, 1
      %p43 = scmp.ne.s32.totalorder %s38, %s40
      %p44 = scmp.eq.s32.totalorder %s9, 0
      %p45 = por %p43, %p44
      %p46 = scmp.ne.s32.totalorder %s38, %s40
      %p47 = scmp.eq.s32.totalorder %s14, 1
      %p48 = por %p46, %p47
      %p49 = scmp.ne.s32.totalorder %s40, %s41
      %p50 = scmp.eq.s32.totalorder %s14, 0
      %p51 = por %p49, %p50
      %p52 = scmp.ne.s32.totalorder %s40, %s41
      %p53 = scmp.eq.s32.totalorder %s15, 1
      %p54 = por %p52, %p53
      %p56 = scmp.ne.s32.totalorder %s41, %s55
      %p57 = scmp.eq.s32.totalorder %s15, 0
      %p58 = por %p56, %p57
      %p59 = scmp.le.s32.totalorder 1, %s9
      %p60 = scmp.lt.s32.totalorder %s9, 3
      %p61 = pnand %p59, %p60
      %p62 = pneg %p61
      // Predicated region
      $region9: #{tpu_custom_call.1} parent=5 // pred_check
        _
      $region10: #{tpu_custom_call.1} parent=5 // pred_check_branch
        %64 = sbr.rel (%p61) target = $region12
      $region11: #{tpu_custom_call.1} parent=5 // pred_region
        %s65 = ssub.s32 %s9, 1
        // Predicated region
        $region13: #{tpu_custom_call.1} parent=11 // pred_check
          %p66 = pneg %p30
        $region14: #{tpu_custom_call.1} parent=11 // pred_check_branch
          %68 = sbr.rel (%p66) target = $region16
        $region15: #{tpu_custom_call.1} parent=11 // pred_region
          %s70 = ssub.s32 128, 128
          %71 = vsyncadd [#allocation3], %s70
          %s73 = sshll.u32 [#allocation2], 4
          %s74 = int_to_ptr.vmem [resolvable:$true] %s73
          %76 = dma.hbm_to_vmem [thread:$0]  %s0, 128, %s74, [#allocation3]
        $region16: #{tpu_custom_call.1} parent=11 // pred_fallthru
          _
      $region12: #{tpu_custom_call.1} parent=5 // pred_fallthru
        _
      %p77 = scmp.lt.s32.totalorder %s9, 2
      // Predicated region
      $region17: #{tpu_custom_call.1} parent=5 // pred_check
        %p78 = pneg %p77
      $region18: #{tpu_custom_call.1} parent=5 // pred_check_branch
        %80 = sbr.rel (%p78) target = $region20
      $region19: #{tpu_custom_call.1} parent=5 // pred_region
        _
      $region20: #{tpu_custom_call.1} parent=5 // pred_fallthru
        _
      %p81 = scmp.le.s32.totalorder 1, %s9
      %p82 = scmp.lt.s32.totalorder %s9, 3
      %p83 = pnand %p81, %p82
      %p84 = pneg %p83
      // Predicated region
      $region21: #{tpu_custom_call.1} parent=5 // pred_check
        _
      $region22: #{tpu_custom_call.1} parent=5 // pred_check_branch
        %86 = sbr.rel (%p83) target = $region24
      $region23: #{tpu_custom_call.1} parent=5 // pred_region
        %s87 = ssub.s32 %s9, 1
        // Predicated region
        $region25: #{tpu_custom_call.1} parent=23 // pred_check
          %p88 = pneg %p30
        $region26: #{tpu_custom_call.1} parent=23 // pred_check_branch
          %90 = sbr.rel (%p88) target = $region28
        $region27: #{tpu_custom_call.1} parent=23 // pred_region
          %91 = dma.done [#allocation3], 128
        $region28: #{tpu_custom_call.1} parent=23 // pred_fallthru
          _
        %p92 = pneg %p30
        %p93 = pneg %p27
        %p94 = pneg %p51
        %p95 = pneg %p48
        %v96 = vld [vmem:[#allocation2] sm:$0xff]
        %97 = vst [vmem:[#allocation5] sm:$0xff] %v96
        // Predicated region
        $region29: #{tpu_custom_call.1} parent=23 // pred_check
          %p98 = pneg %p48
        $region30: #{tpu_custom_call.1} parent=23 // pred_check_branch
          %100 = sbr.rel (%p98) target = $region32
        $region31: #{tpu_custom_call.1} parent=23 // pred_region
          %s102 = ssub.s32 128, 128
          %103 = vsyncadd [#allocation4], %s102
          %s105 = sshll.u32 [#allocation5], 4
          %s106 = int_to_ptr.vmem [resolvable:$true] %s105
          %108 = dma.vmem_to_hbm [thread:$0]  %s106, 128, %s1, [#allocation4]
        $region32: #{tpu_custom_call.1} parent=23 // pred_fallthru
          _
        // Predicated region
        $region33: #{tpu_custom_call.1} parent=23 // pred_check
          %p109 = pneg %p48
        $region34: #{tpu_custom_call.1} parent=23 // pred_check_branch
          %111 = sbr.rel (%p109) target = $region36
        $region35: #{tpu_custom_call.1} parent=23 // pred_region
          %112 = dma.done [#allocation4], 128
        $region36: #{tpu_custom_call.1} parent=23 // pred_fallthru
          _
      $region24: #{tpu_custom_call.1} parent=5 // pred_fallthru
        _
      %p113 = scmp.le.s32.totalorder 2, %s9
      // Predicated region
      $region37: #{tpu_custom_call.1} parent=5 // pred_check
        %p114 = pneg %p113
      $region38: #{tpu_custom_call.1} parent=5 // pred_check_branch
        %116 = sbr.rel (%p114) target = $region40
      $region39: #{tpu_custom_call.1} parent=5 // pred_region
        %s117 = ssub.s32 %s9, 2
      $region40: #{tpu_custom_call.1} parent=5 // pred_fallthru
        _
    $region6: #{tpu_custom_call.1} parent=1 // loop_footer
      %s13 = sadd.s32 1, %s9
    $region7: #{tpu_custom_call.1} parent=1 // loop_footer_branch
      %8 = sbr.rel target = $region3
    $region8: #{tpu_custom_call.1} parent=1 // loop_exit
      _
    %118 = vsyncpa [#allocation3], 1
    %s119 = scalar_lea.sflag [#allocation3], 1
    %120 = vsyncpa %s119, 1
    %121 = vsyncpa [#allocation4], 1
    %s122 = scalar_lea.sflag [#allocation4], 1
    %123 = vsyncpa %s122, 1

// kernel: tpu_custom_call.1
$region0: #{tpu_custom_call.1}
  #allocation0 [shape = 'u32[]', space=smem, size = 0x4, offset = 0x4, fixed_abs, tag = 'smem constant byte address 0x4 - core index']
  #allocation1 [shape = 'u32[144,128]{1,0:T(1,128)}', space=vmem, size = 0x12000, scoped, tag = 'internal scratch']
  %s0 = inlined_call_operand.hbm [shape: f32[16,32], index: 0, kind: input, shape index: {}]
  %s1 = inlined_call_operand.hbm [shape: f32[32,32], index: 1, kind: input, shape index: {}]
  %s2 = inlined_call_operand.hbm [shape: f32[3,32], index: 2, kind: input, shape index: {}]
  %s3 = inlined_call_operand.hbm [shape: f32[32,128], index: 3, kind: input, shape index: {}]
  %s4 = inlined_call_operand.hbm [shape: f32[1,128], index: 4, kind: input, shape index: {}]
  %s5 = inlined_call_operand.hbm [shape: f32[16,128], index: 5, kind: output, shape index: {}]
  %s6 = sld [smem:[#allocation0]]
  $region50: #{tpu_custom_call.1} parent=0
    _
  %s8 = ssub.s32 1, %s6
  %s9 = scalar_select 0, %s8, %s6
  $region1: #{tpu_custom_call.1} parent=0
    #allocation2 [shape = 'u8[8192]{0}', space=vmem, size = 0x2000, scoped, tag = 'input window, operand 0, single buffered']
    #allocation3 [shape = 's32[1]{0}', space=sflag, size = 0x4, scoped, tag = 'scoped memory for tpu_custom_call.1']
    #allocation4 [shape = 's32[1]{0}', space=sflag, size = 0x4, scoped, tag = 'scoped memory for tpu_custom_call.1']
    #allocation5 [shape = 'u8[16384]{0}', space=vmem, size = 0x4000, scoped, tag = 'input window, operand 1, single buffered']
    #allocation6 [shape = 's32[1]{0}', space=sflag, size = 0x4, scoped, tag = 'scoped memory for tpu_custom_call.1']
    #allocation7 [shape = 'u8[2048]{0}', space=vmem, size = 0x800, scoped, tag = 'input window, operand 2, single buffered']
    #allocation8 [shape = 'u8[16384]{0}', space=vmem, size = 0x4000, scoped, tag = 'input window, operand 3, single buffered']
    #allocation9 [shape = 's32[1]{0}', space=sflag, size = 0x4, scoped, tag = 'scoped memory for tpu_custom_call.1']
    #allocation10 [shape = 'u8[512]{0}', space=vmem, size = 0x400, scoped, tag = 'input window, operand 4, single buffered']
    #allocation11 [shape = 'u8[8192]{0}', space=vmem, size = 0x2000, scoped, tag = 'output window, operand 0, single buffered']
    %10 = vsyncpa [#allocation3], 0
    %11 = vsyncpa [#allocation6], 0
    %12 = vsyncpa [#allocation9], 0
    %13 = vsyncpa [#allocation4], 0
    // Predicated region
    $region2: #{tpu_custom_call.1} parent=1 // pred_check
      _
    $region3: #{tpu_custom_call.1} parent=1 // pred_check_branch
      %15 = sbr.rel (0) target = $region5
    $region4: #{tpu_custom_call.1} parent=1 // pred_region
      %s17 = ssub.s32 256, 256
      %18 = vsyncadd [#allocation3], %s17
      %s19 = sshll.u32 [#allocation2], 4
      %s20 = int_to_ptr.vmem [resolvable:$true] %s19
      %25 = dma.hbm_to_vmem [thread:$0]  %s0, 256, %s20, [#allocation3], 128, 128, 8
    $region5: #{tpu_custom_call.1} parent=1 // pred_fallthru
      _
    // Predicated region
    $region6: #{tpu_custom_call.1} parent=1 // pred_check
      _
    $region7: #{tpu_custom_call.1} parent=1 // pred_check_branch
      %27 = sbr.rel (0) target = $region9
    $region8: #{tpu_custom_call.1} parent=1 // pred_region
      %s29 = ssub.s32 512, 512
      %30 = vsyncadd [#allocation6], %s29
      %s31 = sshll.u32 [#allocation5], 4
      %s32 = int_to_ptr.vmem [resolvable:$true] %s31
      %37 = dma.hbm_to_vmem [thread:$0]  %s1, 512, %s32, [#allocation6], 128, 128, 8
    $region9: #{tpu_custom_call.1} parent=1 // pred_fallthru
      _
    // Predicated region
    $region10: #{tpu_custom_call.1} parent=1 // pred_check
      _
    $region11: #{tpu_custom_call.1} parent=1 // pred_check_branch
      %39 = sbr.rel (0) target = $region13
    $region12: #{tpu_custom_call.1} parent=1 // pred_region
      %s41 = ssub.s32 64, 64
      %42 = vsyncadd [#allocation6], %s41
      %s44 = sshll.u32 [#allocation7], 4
      %s45 = int_to_ptr.vmem [resolvable:$true] %s44
      %47 = dma.hbm_to_vmem [thread:$0]  %s2, 64, %s45, [#allocation6]
    $region13: #{tpu_custom_call.1} parent=1 // pred_fallthru
      _
    // Predicated region
    $region14: #{tpu_custom_call.1} parent=1 // pred_check
      _
    $region15: #{tpu_custom_call.1} parent=1 // pred_check_branch
      %49 = sbr.rel (0) target = $region17
    $region16: #{tpu_custom_call.1} parent=1 // pred_region
      %s51 = ssub.s32 512, 512
      %52 = vsyncadd [#allocation9], %s51
      %s53 = sshll.u32 [#allocation8], 4
      %s54 = int_to_ptr.vmem [resolvable:$true] %s53
      %59 = dma.hbm_to_vmem [thread:$0]  %s3, 512, %s54, [#allocation9], 128, 128, 8
    $region17: #{tpu_custom_call.1} parent=1 // pred_fallthru
      _
    // Predicated region
    $region18: #{tpu_custom_call.1} parent=1 // pred_check
      _
    $region19: #{tpu_custom_call.1} parent=1 // pred_check_branch
      %61 = sbr.rel (0) target = $region21
    $region20: #{tpu_custom_call.1} parent=1 // pred_region
      %s63 = ssub.s32 16, 16
      %64 = vsyncadd [#allocation9], %s63
      %s66 = sshll.u32 [#allocation10], 4
      %s67 = int_to_ptr.vmem [resolvable:$true] %s66
      %69 = dma.hbm_to_vmem [thread:$0]  %s4, 16, %s67, [#allocation9]
    $region21: #{tpu_custom_call.1} parent=1 // pred_fallthru
      _
    // Predicated region
    $region22: #{tpu_custom_call.1} parent=1 // pred_check
      _
    $region23: #{tpu_custom_call.1} parent=1 // pred_check_branch
      %71 = sbr.rel (0) target = $region25
    $region24: #{tpu_custom_call.1} parent=1 // pred_region
      %72 = dma.done [#allocation3], 256
    $region25: #{tpu_custom_call.1} parent=1 // pred_fallthru
      _
    // Predicated region
    $region26: #{tpu_custom_call.1} parent=1 // pred_check
      _
    $region27: #{tpu_custom_call.1} parent=1 // pred_check_branch
      %74 = sbr.rel (0) target = $region29
    $region28: #{tpu_custom_call.1} parent=1 // pred_region
      %75 = dma.done [#allocation6], 512
    $region29: #{tpu_custom_call.1} parent=1 // pred_fallthru
      _
    // Predicated region
    $region30: #{tpu_custom_call.1} parent=1 // pred_check
      _
    $region31: #{tpu_custom_call.1} parent=1 // pred_check_branch
      %77 = sbr.rel (0) target = $region33
    $region32: #{tpu_custom_call.1} parent=1 // pred_region
      %78 = dma.done [#allocation6], 64
    $region33: #{tpu_custom_call.1} parent=1 // pred_fallthru
      _
    // Predicated region
    $region34: #{tpu_custom_call.1} parent=1 // pred_check
      _
    $region35: #{tpu_custom_call.1} parent=1 // pred_check_branch
      %80 = sbr.rel (0) target = $region37
    $region36: #{tpu_custom_call.1} parent=1 // pred_region
      %81 = dma.done [#allocation9], 512
    $region37: #{tpu_custom_call.1} parent=1 // pred_fallthru
      _
    // Predicated region
    $region38: #{tpu_custom_call.1} parent=1 // pred_check
      _
    $region39: #{tpu_custom_call.1} parent=1 // pred_check_branch
      %83 = sbr.rel (0) target = $region41
    $region40: #{tpu_custom_call.1} parent=1 // pred_region
      %84 = dma.done [#allocation9], 16
    $region41: #{tpu_custom_call.1} parent=1 // pred_fallthru
      _
    %v85 = vld [vmem:[#allocation2] sm:$0xff]
    %v86 = vld [vmem:[#allocation2 + $0x8] sm:$0xff]
    %v87 = vld [vmem:[#allocation7] sm:$0x7]
    %v88 = vld [vmem:[#allocation5] sm:$0xff]
    %v89 = vld [vmem:[#allocation5 + $0x8] sm:$0xff]
    %v90 = vld [vmem:[#allocation5 + $0x10] sm:$0xff]
    %v91 = vld [vmem:[#allocation5 + $0x18] sm:$0xff]
    %v92 = vlaneseq
    %v93 = vshrl.u32 %v92, 7
    %v94 = vsub.s32 0, %v93
    %v95 = vrot.slane %v87, %v94
    %vm96 = vcmask 261120
    %v98 = vsel %vm96, %v85, 0
    %v101 = vsel %vm96, %v86, 0
    %103 = vmatprep.subr.mxu0 0.0
    %104 = vmatpush1.msra.mxu0 %v88
    %105 = vmatprep.subr.mxu0 0.0
    %106 = vmatpush1.msra.mxu0 %v89
    %107 = vmatprep.subr.mxu0 0.0
    %108 = vmatpush1.msra.mxu0 %v90
    %109 = vmatprep.subr.mxu0 0.0
    %110 = vmatpush1.msra.mxu0 %v91
    %111 = vmatprep.subr.mxu0 0.0
    %112 = vmatpush1.msra.mxu0 0.0
    %113 = vmatprep.subr.mxu0 0.0
    %114 = vmatpush1.msra.mxu0 0.0
    %115 = vmatprep.subr.mxu0 0.0
    %116 = vmatpush1.msra.mxu0 0.0
    %117 = vmatprep.subr.mxu0 0.0
    %118 = vmatpush1.msra.mxu0 0.0
    %119 = vmatprep.subr.mxu0 0.0
    %120 = vmatpush1.msra.mxu0 0.0
    %121 = vmatprep.subr.mxu0 0.0
    %122 = vmatpush1.msra.mxu0 0.0
    %123 = vmatprep.subr.mxu0 0.0
    %124 = vmatpush1.msra.mxu0 0.0
    %125 = vmatprep.subr.mxu0 0.0
    %126 = vmatpush1.msra.mxu0 0.0
    %127 = vmatprep.subr.mxu0 0.0
    %128 = vmatpush1.msra.mxu0 0.0
    %129 = vmatprep.subr.mxu0 0.0
    %130 = vmatpush1.msra.mxu0 0.0
    %131 = vmatprep.subr.mxu0 0.0
    %132 = vmatpush1.msra.mxu0 0.0
    %133 = vmatprep.subr.mxu0 0.0
    %134 = vmatpush1.msra.mxu0 0.0
    %135 = vmatprep.subr.mxu0 0.0
    %136 = vmatpush1.msra.mxu0 0.0
    %137 = vmatprep.subr.mxu0 0.0
    %138 = vmatpush1.msra.mxu0 0.0
    %139 = vmatprep.subr.mxu0 0.0
    %140 = vmatpush1.msra.mxu0 0.0
    %141 = vmatprep.subr.mxu0 0.0
    %142 = vmatpush1.msra.mxu0 0.0
    %143 = vmatprep.subr.mxu0 0.0
    %144 = vmatpush1.msra.mxu0 0.0
    %145 = vmatprep.subr.mxu0 0.0
    %146 = vmatpush1.msra.mxu0 0.0
    %147 = vmatprep.subr.mxu0 0.0
    %148 = vmatpush1.msra.mxu0 0.0
    %149 = vmatprep.subr.mxu0 0.0
    %150 = vmatpush1.msra.mxu0 0.0
    %151 = vmatprep.subr.mxu0 0.0
    %152 = vmatpush1.msra.mxu0 0.0
    %153 = vmatprep.subr.mxu0 0.0
    %154 = vmatpush1.msra.mxu0 0.0
    %155 = vmatprep.subr.mxu0 0.0
    %156 = vmatpush1.msra.mxu0 0.0
    %157 = vmatprep.subr.mxu0 0.0
    %158 = vmatpush1.msra.mxu0 0.0
    %159 = vmatprep.subr.mxu0 0.0
    %160 = vmatpush1.msra.mxu0 0.0
    %161 = vmatprep.subr.mxu0 0.0
    %162 = vmatpush1.msra.mxu0 0.0
    %163 = vmatprep.subr.mxu0 0.0
    %164 = vmatpush1.msra.mxu0 0.0
    %165 = vmatprep.subr.mxu0 0.0
    %166 = vmatpush1.msra.mxu0 0.0
    %167 = vmatprep.mubr.f32.mxu0 0.0
    %168 = vmatmul.mubr.f32.gmra.mrb[0].mxu0 %v98
    %v169 = vpop.f32.mrb[0].mxu0
    %v170 = vadd.f32 %v95, %v169
    %v171 = vpop.f32.mrb[0].mxu0
    %172 = vmatprep.mubr.f32.mxu0 0.0
    %173 = vmatmul.mubr.f32.gmra.mrb[0].mxu0 %v101
    %v174 = vpop.f32.mrb[0].mxu0
    %v175 = vadd.f32 %v95, %v174
    %v176 = vpop.f32.mrb[0].mxu0
    %177 = vdwg.mxu0
    %v178 = vmax.f32 %v170, 0.0
    %v179 = vmax.f32 %v175, 0.0
    %v180 = vsel %vm96, %v178, 0.0
    %181 = vadd.xlane.f32.xlu0 %v180
    %v182 = vpop.xlane.xlu0 %181
    %v183 = vsel %vm96, %v179, 0.0
    %184 = vadd.xlane.f32.xlu0 %v183
    %v185 = vpop.xlane.xlu0 %184
    %v186 = vrcp.pop 32.0
    %v187 = vmul.f32 %v182, %v186
    %v188 = vmul.f32 %v185, %v186
    %v189 = vsub.f32 %v178, %v187
    %v190 = vsub.f32 %v179, %v188
    %v191 = vmul.f32 %v189, %v189
    %v192 = vmul.f32 %v190, %v190
    %v193 = vsel %vm96, %v191, 0.0
    %194 = vadd.xlane.f32.xlu0 %v193
    %v195 = vpop.xlane.xlu0 %194
    %v196 = vsel %vm96, %v192, 0.0
    %197 = vadd.xlane.f32.xlu0 %v196
    %v198 = vpop.xlane.xlu0 %197
    %v199 = vmul.f32 %v195, %v186
    %v200 = vmul.f32 %v198, %v186
    %v201 = vadd.f32 %v199, 1e-12
    %v202 = vadd.f32 %v200, 1e-12
    %v203 = vrsqrt.pop %v201
    %v204 = vrsqrt.pop %v202
    %v205 = vmul.f32 %v189, %v203
    %v206 = vmul.f32 %v190, %v204
    %v207 = vlaneseq
    %v208 = vshrl.u32 %v207, 7
    %v209 = vsub.s32 1, %v208
    %v210 = vrot.slane %v87, %v209
    %v211 = vmul.f32 %v205, %v210
    %v212 = vmul.f32 %v206, %v210
    %v213 = vlaneseq
    %v214 = vshrl.u32 %v213, 7
    %v215 = vsub.s32 2, %v214
    %v216 = vrot.slane %v87, %v215
    %v217 = vadd.f32 %v211, %v216
    %v218 = vadd.f32 %v212, %v216
    %v219 = vld [vmem:[#allocation8] sm:$0xff]
    %v220 = vld [vmem:[#allocation8 + $0x8] sm:$0xff]
    %v221 = vld [vmem:[#allocation8 + $0x10] sm:$0xff]
    %v222 = vld [vmem:[#allocation8 + $0x18] sm:$0xff]
    %v223 = vld [vmem:[#allocation10] sm:$0x1]
    %v225 = vlaneseq
    %v226 = vshrl.u32 %v225, 7
    %v227 = vsub.s32 0, %v226
    %v228 = vrot.slane %v223, %v227
    %v231 = vsel %vm96, %v217, 0
    %v234 = vsel %vm96, %v218, 0
    %236 = vmatprep.subr.mxu0 0.0
    %237 = vmatpush1.msra.mxu0 %v219
    %238 = vmatprep.subr.mxu0 0.0
    %239 = vmatpush1.msra.mxu0 %v220
    %240 = vmatprep.subr.mxu0 0.0
    %241 = vmatpush1.msra.mxu0 %v221
    %242 = vmatprep.subr.mxu0 0.0
    %243 = vmatpush1.msra.mxu0 %v222
    %244 = vmatprep.subr.mxu0 0.0
    %245 = vmatpush1.msra.mxu0 0.0
    %246 = vmatprep.subr.mxu0 0.0
    %247 = vmatpush1.msra.mxu0 0.0
    %248 = vmatprep.subr.mxu0 0.0
    %249 = vmatpush1.msra.mxu0 0.0
    %250 = vmatprep.subr.mxu0 0.0
    %251 = vmatpush1.msra.mxu0 0.0
    %252 = vmatprep.subr.mxu0 0.0
    %253 = vmatpush1.msra.mxu0 0.0
    %254 = vmatprep.subr.mxu0 0.0
    %255 = vmatpush1.msra.mxu0 0.0
    %256 = vmatprep.subr.mxu0 0.0
    %257 = vmatpush1.msra.mxu0 0.0
    %258 = vmatprep.subr.mxu0 0.0
    %259 = vmatpush1.msra.mxu0 0.0
    %260 = vmatprep.subr.mxu0 0.0
    %261 = vmatpush1.msra.mxu0 0.0
    %262 = vmatprep.subr.mxu0 0.0
    %263 = vmatpush1.msra.mxu0 0.0
    %264 = vmatprep.subr.mxu0 0.0
    %265 = vmatpush1.msra.mxu0 0.0
    %266 = vmatprep.subr.mxu0 0.0
    %267 = vmatpush1.msra.mxu0 0.0
    %268 = vmatprep.subr.mxu0 0.0
    %269 = vmatpush1.msra.mxu0 0.0
    %270 = vmatprep.subr.mxu0 0.0
    %271 = vmatpush1.msra.mxu0 0.0
    %272 = vmatprep.subr.mxu0 0.0
    %273 = vmatpush1.msra.mxu0 0.0
    %274 = vmatprep.subr.mxu0 0.0
    %275 = vmatpush1.msra.mxu0 0.0
    %276 = vmatprep.subr.mxu0 0.0
    %277 = vmatpush1.msra.mxu0 0.0
    %278 = vmatprep.subr.mxu0 0.0
    %279 = vmatpush1.msra.mxu0 0.0
    %280 = vmatprep.subr.mxu0 0.0
    %281 = vmatpush1.msra.mxu0 0.0
    %282 = vmatprep.subr.mxu0 0.0
    %283 = vmatpush1.msra.mxu0 0.0
    %284 = vmatprep.subr.mxu0 0.0
    %285 = vmatpush1.msra.mxu0 0.0
    %286 = vmatprep.subr.mxu0 0.0
    %287 = vmatpush1.msra.mxu0 0.0
    %288 = vmatprep.subr.mxu0 0.0
    %289 = vmatpush1.msra.mxu0 0.0
    %290 = vmatprep.subr.mxu0 0.0
    %291 = vmatpush1.msra.mxu0 0.0
    %292 = vmatprep.subr.mxu0 0.0
    %293 = vmatpush1.msra.mxu0 0.0
    %294 = vmatprep.subr.mxu0 0.0
    %295 = vmatpush1.msra.mxu0 0.0
    %296 = vmatprep.subr.mxu0 0.0
    %297 = vmatpush1.msra.mxu0 0.0
    %298 = vmatprep.subr.mxu0 0.0
    %299 = vmatpush1.msra.mxu0 0.0
    %300 = vmatprep.mubr.f32.mxu0 0.0
    %301 = vmatmul.mubr.f32.gmra.mrb[0].mxu0 %v231
    %v302 = vpop.f32.mrb[0].mxu0
    %v303 = vadd.f32 %v228, %v302
    %v304 = vpop.f32.mrb[0].mxu0
    %305 = vmatprep.mubr.f32.mxu0 0.0
    %306 = vmatmul.mubr.f32.gmra.mrb[0].mxu0 %v234
    %v307 = vpop.f32.mrb[0].mxu0
    %v308 = vadd.f32 %v228, %v307
    %v309 = vpop.f32.mrb[0].mxu0
    %310 = vdwg.mxu0
    %311 = vst [vmem:[#allocation11] sm:$0xff] %v303
    %312 = vst [vmem:[#allocation11 + $0x8] sm:$0xff] %v308
    // Predicated region
    $region42: #{tpu_custom_call.1} parent=1 // pred_check
      _
    $region43: #{tpu_custom_call.1} parent=1 // pred_check_branch
      %314 = sbr.rel (0) target = $region45
    $region44: #{tpu_custom_call.1} parent=1 // pred_region
      %s316 = ssub.s32 256, 256
      %317 = vsyncadd [#allocation4], %s316
      %s318 = sshll.u32 [#allocation11], 4
      %s319 = int_to_ptr.vmem [resolvable:$true] %s318
      %324 = dma.vmem_to_hbm [thread:$0]  %s319, 256, %s5, [#allocation4], 128, 128, 8
    $region45: #{tpu_custom_call.1} parent=1 // pred_fallthru
      _
    // Predicated region
    $region46: #{tpu_custom_call.1} parent=1 // pred_check
      _
    $region47: #{tpu_custom_call.1} parent=1 // pred_check_branch
      %326 = sbr.rel (0) target = $region49
    $region48: #{tpu_custom_call.1} parent=1 // pred_region
      %327 = dma.done [#allocation4], 256
    $region49: #{tpu_custom_call.1} parent=1 // pred_fallthru
      _
    %328 = vsyncpa [#allocation3], 1
    %329 = vsyncpa [#allocation6], 1
    %330 = vsyncpa [#allocation9], 1
    %331 = vsyncpa [#allocation4], 1

</llo_original>
